<compile_context>
chip_gen: v5e
topology: v5e:2x2
jax: 0.10.0
libtpu: 0.0.40
codegen_flags: <defaults>
</compile_context>

<pallas_src>
import functools

import jax
import jax.numpy as jnp
from jax.experimental import pallas as pl
from jax.experimental.pallas import tpu as pltpu


def _round_up(x: int, m: int) -> int:
    return pl.cdiv(x, m) * m


def _representation_kernel(e_ref, h_ref,
                           w1e_ref, w1h_ref, b1_ref, lng_ref, lnb_ref,
                           w2_ref, we_ref, bo_ref, grp_ref,
                           o_ref, *, uniform: float, n_cls: int):
    e = e_ref[...]

    # --- eh_to_inter layer 1: split-K Linear(E+H -> F) on the MXU ------------
    # e @ w1e + h @ w1h == concat(e, h) @ w1   (f32 accumulation)
    x = (jnp.dot(e, w1e_ref[...], preferred_element_type=jnp.float32)
         + jnp.dot(h_ref[...], w1h_ref[...], preferred_element_type=jnp.float32)
         + b1_ref[...])

    # --- LayerNormSiLU (LayerNorm eps=1e-3, affine), all in f32 --------------
    mean = jnp.mean(x, axis=-1, keepdims=True)
    xc = x - mean
    var = jnp.mean(xc * xc, axis=-1, keepdims=True)
    x = xc * jax.lax.rsqrt(var + 1e-3)
    x = x * lng_ref[...] + lnb_ref[...]
    x = x * jax.nn.sigmoid(x)                      # SiLU

    # --- eh_to_inter layer 2 + e_to_inter skip (output biases pre-fused) -----
    x = x.astype(w2_ref.dtype)                     # bf16 on the MXU if requested
    z = (jnp.dot(x, w2_ref[...], preferred_element_type=jnp.float32)
         + jnp.dot(e, we_ref[...], preferred_element_type=jnp.float32)
         + bo_ref[...])

    # --- grouped log-softmax on the flat, lane-dense (tile_b, n_out) layout --
    # Row max instead of per-group max: log-softmax is shift-invariant, so the
    # result is identical, and zs <= 0 keeps exp() overflow-safe.  (Only a
    # group whose logits all sit ~88 below the row max could underflow — far
    # outside this module's logit range.)
    m = jnp.max(z, axis=-1, keepdims=True)
    zs = z - m
    p = jnp.exp(zs)
    # Per-group sum of exp AND broadcast back to every lane of its group in a
    # single tiny MXU matmul against the block-diagonal ones matrix `grp`
    # (kept in f32 so the reduction is exact).
    s = jnp.dot(p, grp_ref[...], preferred_element_type=jnp.float32)
    logp = zs - jnp.log(s)

    if uniform:
        probs = jnp.exp(logp)
        logp = jnp.log((1.0 - uniform) * probs + uniform / n_cls)

    o_ref[...] = logp.astype(o_ref.dtype)


def representation_forward(e, h, params, n_dis, n_cls, uniform=0.0,
                           *, compute_dtype=jnp.float32, block_b=256):
    """Pallas wrapper. e: (B, E), h: (B, H) -> (B, n_dis, n_cls) log-probs."""
    B, E = e.shape
    H = h.shape[1]
    n_out = n_dis * n_cls
    f32 = jnp.float32

    # MXU operands in compute_dtype (f32 or bf16); elementwise params stay f32.
    e_c = e.astype(compute_dtype)
    h_c = h.astype(compute_dtype)
    w1 = params["w1"].astype(compute_dtype)
    w1e, w1h = w1[:E], w1[E:]                      # split-K, no concat of (e,h)
    w2 = params["w2"].astype(compute_dtype)
    we = params["we"].astype(compute_dtype)
    b1 = params["b1"].astype(f32)
    ln_g = params["ln_g"].astype(f32)
    ln_b = params["ln_b"].astype(f32)
    b_out = (params["b2"] + params["be"]).astype(f32)  # fuse the two output biases

    # Block-diagonal group-indicator matrix: (exp(zs) @ grp) gives each lane the
    # sum of exp over its own n_cls-group.
    gidx = jnp.arange(n_out, dtype=jnp.int32) // n_cls
    grp = (gidx[:, None] == gidx[None, :]).astype(f32)

    # Batch tiling (pad ragged batch with zero rows; sliced off afterwards).
    tile_b = max(8, min(int(block_b), _round_up(B, 8)))
    B_pad = _round_up(B, tile_b)
    if B_pad != B:
        e_c = jnp.pad(e_c, ((0, B_pad - B), (0, 0)))
        h_c = jnp.pad(h_c, ((0, B_pad - B), (0, 0)))

    kernel = functools.partial(_representation_kernel,
                               uniform=float(uniform), n_cls=int(n_cls))

    def full_spec(a):  # whole array resident in VMEM across the batch grid
        return pl.BlockSpec(a.shape, lambda i: (0, 0))

    out_flat = pl.pallas_call(
        kernel,
        out_shape=jax.ShapeDtypeStruct((B_pad, n_out), jnp.float32),
        grid=(B_pad // tile_b,),
        in_specs=[
            pl.BlockSpec((tile_b, E), lambda i: (i, 0)),       # e tile
            pl.BlockSpec((tile_b, H), lambda i: (i, 0)),       # h tile
            full_spec(w1e), full_spec(w1h), full_spec(b1),
            full_spec(ln_g), full_spec(ln_b),
            full_spec(w2), full_spec(we), full_spec(b_out), full_spec(grp),
        ],
        # lane-dense flat output; unflatten happens outside the kernel
        out_specs=pl.BlockSpec((tile_b, n_out), lambda i: (i, 0)),
        compiler_params=pltpu.CompilerParams(
            dimension_semantics=("parallel",)),
    )(e_c, h_c, w1e, w1h, b1, ln_g, ln_b, w2, we, b_out, grp)

    return out_flat[:B].reshape(B, n_dis, n_cls)


def init_params(key, embed_dim, h_dim, mlp_features, n_out):
    ks = jax.random.split(key, 6)
    s = 0.02
    return {
        # layer 1 of eh_to_inter: single fused (E+H, F) weight (matches the
        # PyTorch concat + Linear structure; split into E/H halves in the wrapper)
        "w1": s * jax.random.normal(ks[0], (embed_dim + h_dim, mlp_features), jnp.float32),
        "b1": jnp.zeros((1, mlp_features), jnp.float32),
        # LayerNorm affine params
        "ln_g": jnp.ones((1, mlp_features), jnp.float32),
        "ln_b": jnp.zeros((1, mlp_features), jnp.float32),
        # layer 2 of eh_to_inter
        "w2": s * jax.random.normal(ks[1], (mlp_features, n_out), jnp.float32),
        "b2": s * jax.random.normal(ks[2], (1, n_out), jnp.float32),
        # e_to_inter (exists because mlp_layers > 1)
        "we": s * jax.random.normal(ks[3], (embed_dim, n_out), jnp.float32),
        "be": s * jax.random.normal(ks[4], (1, n_out), jnp.float32),
    }


def reference_forward(e, h, p, n_dis, n_cls, uniform=0.0):
    eh = jnp.concatenate([e, h], axis=-1)
    x = eh @ p["w1"] + p["b1"]
    mean = x.mean(-1, keepdims=True)
    var = ((x - mean) ** 2).mean(-1, keepdims=True)
    x = (x - mean) * jax.lax.rsqrt(var + 1e-3) * p["ln_g"] + p["ln_b"]
    x = x * jax.nn.sigmoid(x)
    x1 = x @ p["w2"] + p["b2"] + e @ p["we"] + p["be"]
    z = x1.reshape(e.shape[0], n_dis, n_cls)
    logp = jax.nn.log_softmax(z, axis=-1)
    if uniform:
        logp = jnp.log((1 - uniform) * jnp.exp(logp) + uniform / n_cls)
    return logp


if __name__ == "__main__":
    # small shapes consistent with Representation(ls=(4,8), embed_dim=32,
    # h_dim=32, mlp_features=64, mlp_layers=2, uniform=0)
    B, E, H, F = 8, 32, 32, 64
    n_dis, n_cls = 4, 8

    key = jax.random.PRNGKey(0)
    ke, kh, kp = jax.random.split(key, 3)
    e = jax.random.normal(ke, (B, E), jnp.float32)
    h = jax.random.normal(kh, (B, H), jnp.float32)
    params = init_params(kp, E, H, F, n_dis * n_cls)

    ref = reference_forward(e, h, params, n_dis, n_cls, uniform=0.0)

    # --- f32 path (tight check) ---------------------------------------------
    out = representation_forward(e, h, params, n_dis, n_cls, uniform=0.0,
                                 compute_dtype=jnp.float32)
    out = jax.block_until_ready(out)
    assert out.shape == (B, n_dis, n_cls)
    assert bool(jnp.allclose(out, ref, atol=1e-4, rtol=1e-4)), "f32 mismatch vs reference"
    assert bool(jnp.allclose(jnp.exp(out).sum(-1), 1.0, atol=1e-4))

    # --- bf16 MXU path (weights/activations bf16, LN/softmax in f32) ---------
    out_bf16 = representation_forward(e, h, params, n_dis, n_cls, uniform=0.0,
                                      compute_dtype=jnp.bfloat16)
    out_bf16 = jax.block_until_ready(out_bf16)
    assert bool(jnp.allclose(out_bf16, ref, atol=3e-2)), "bf16 mismatch vs reference"

    # --- ragged batch (exercises the pad/slice path) --------------------------
    B2 = 10
    e2 = jax.random.normal(jax.random.PRNGKey(1), (B2, E), jnp.float32)
    h2 = jax.random.normal(jax.random.PRNGKey(2), (B2, H), jnp.float32)
    out2 = jax.block_until_ready(
        representation_forward(e2, h2, params, n_dis, n_cls))
    ref2 = reference_forward(e2, h2, params, n_dis, n_cls)
    assert out2.shape == (B2, n_dis, n_cls)
    assert bool(jnp.allclose(out2, ref2, atol=1e-4, rtol=1e-4)), "ragged-batch mismatch"

    # --- uniform-mix branch ---------------------------------------------------
    out_u = jax.block_until_ready(
        representation_forward(e, h, params, n_dis, n_cls, uniform=0.01))
    ref_u = reference_forward(e, h, params, n_dis, n_cls, uniform=0.01)
    assert bool(jnp.allclose(out_u, ref_u, atol=1e-4, rtol=1e-4)), "uniform branch mismatch"

    print("KERNEL_OK")
</pallas_src>

<mosaic_0001>
module attributes {stable_mosaic.version = 11 : i64} {
  func.func @_representation_kernel(%arg0: i32, %arg1: memref<8x32xf32, #tpu.memory_space<vmem>>, %arg2: memref<8x32xf32, #tpu.memory_space<vmem>>, %arg3: memref<32x64xf32, #tpu.memory_space<vmem>>, %arg4: memref<32x64xf32, #tpu.memory_space<vmem>>, %arg5: memref<1x64xf32, #tpu.memory_space<vmem>>, %arg6: memref<1x64xf32, #tpu.memory_space<vmem>>, %arg7: memref<1x64xf32, #tpu.memory_space<vmem>>, %arg8: memref<64x32xf32, #tpu.memory_space<vmem>>, %arg9: memref<32x32xf32, #tpu.memory_space<vmem>>, %arg10: memref<1x32xf32, #tpu.memory_space<vmem>>, %arg11: memref<32x32xf32, #tpu.memory_space<vmem>>, %arg12: memref<8x32xf32, #tpu.memory_space<vmem>>) attributes {dimension_semantics = [#tpu.dimension_semantics<parallel>], iteration_bounds = array<i64: 1>, scalar_prefetch = 0 : i64, scratch_operands = 0 : i64, tpu.core_type = #tpu.core_type<tc>, window_params = [{transform_indices = @transform_0, window_bounds = array<i64: 8, 32>}, {transform_indices = @transform_1, window_bounds = array<i64: 8, 32>}, {pipeline_mode = #tpu.pipeline_mode<synchronous>, transform_indices = @transform_2, window_bounds = array<i64: 32, 64>}, {pipeline_mode = #tpu.pipeline_mode<synchronous>, transform_indices = @transform_3, window_bounds = array<i64: 32, 64>}, {pipeline_mode = #tpu.pipeline_mode<synchronous>, transform_indices = @transform_4, window_bounds = array<i64: 1, 64>}, {pipeline_mode = #tpu.pipeline_mode<synchronous>, transform_indices = @transform_5, window_bounds = array<i64: 1, 64>}, {pipeline_mode = #tpu.pipeline_mode<synchronous>, transform_indices = @transform_6, window_bounds = array<i64: 1, 64>}, {pipeline_mode = #tpu.pipeline_mode<synchronous>, transform_indices = @transform_7, window_bounds = array<i64: 64, 32>}, {pipeline_mode = #tpu.pipeline_mode<synchronous>, transform_indices = @transform_8, window_bounds = array<i64: 32, 32>}, {pipeline_mode = #tpu.pipeline_mode<synchronous>, transform_indices = @transform_9, window_bounds = array<i64: 1, 32>}, {pipeline_mode = #tpu.pipeline_mode<synchronous>, transform_indices = @transform_10, window_bounds = array<i64: 32, 32>}, {transform_indices = @transform_11, window_bounds = array<i64: 8, 32>}]} {
    %c0 = arith.constant 0 : index
    %c0_0 = arith.constant 0 : index
    %0 = vector.load %arg1[%c0, %c0_0] : memref<8x32xf32, #tpu.memory_space<vmem>>, vector<8x32xf32>
    %c0_1 = arith.constant 0 : index
    %c0_2 = arith.constant 0 : index
    %1 = vector.load %arg3[%c0_1, %c0_2] : memref<32x64xf32, #tpu.memory_space<vmem>>, vector<32x64xf32>
    %cst = arith.constant dense<0.000000e+00> : vector<8x64xf32>
    %2 = tpu.matmul %0, %1, %cst {dimension_numbers = #tpu.dot_dimension_numbers<[1], [0], [0], [1], [0, 0, 1, 1], [], []>} : vector<8x32xf32>, vector<32x64xf32>, vector<8x64xf32> -> vector<8x64xf32>
    %c0_3 = arith.constant 0 : index
    %c0_4 = arith.constant 0 : index
    %3 = vector.load %arg2[%c0_3, %c0_4] : memref<8x32xf32, #tpu.memory_space<vmem>>, vector<8x32xf32>
    %c0_5 = arith.constant 0 : index
    %c0_6 = arith.constant 0 : index
    %4 = vector.load %arg4[%c0_5, %c0_6] : memref<32x64xf32, #tpu.memory_space<vmem>>, vector<32x64xf32>
    %cst_7 = arith.constant dense<0.000000e+00> : vector<8x64xf32>
    %5 = tpu.matmul %3, %4, %cst_7 {dimension_numbers = #tpu.dot_dimension_numbers<[1], [0], [0], [1], [0, 0, 1, 1], [], []>} : vector<8x32xf32>, vector<32x64xf32>, vector<8x64xf32> -> vector<8x64xf32>
    %6 = arith.addf %2, %5 : vector<8x64xf32>
    %c0_8 = arith.constant 0 : index
    %c0_9 = arith.constant 0 : index
    %7 = vector.load %arg5[%c0_8, %c0_9] : memref<1x64xf32, #tpu.memory_space<vmem>>, vector<1x64xf32>
    %8 = vector.broadcast %7 : vector<1x64xf32> to vector<8x64xf32>
    %9 = arith.addf %6, %8 : vector<8x64xf32>
    %cst_10 = arith.constant dense<0.000000e+00> : vector<8xf32>
    %10 = vector.multi_reduction <add>, %9, %cst_10 [1] : vector<8x64xf32> to vector<8xf32>
    %11 = vector.shape_cast %10 : vector<8xf32> to vector<8x1xf32>
    %cst_11 = arith.constant 6.400000e+01 : f32
    %12 = vector.broadcast %cst_11 : f32 to vector<8x1xf32>
    %13 = arith.divf %11, %12 : vector<8x1xf32>
    %14 = vector.broadcast %13 : vector<8x1xf32> to vector<8x64xf32>
    %15 = arith.subf %9, %14 : vector<8x64xf32>
    %16 = arith.mulf %15, %15 : vector<8x64xf32>
    %cst_12 = arith.constant dense<0.000000e+00> : vector<8xf32>
    %17 = vector.multi_reduction <add>, %16, %cst_12 [1] : vector<8x64xf32> to vector<8xf32>
    %18 = vector.shape_cast %17 : vector<8xf32> to vector<8x1xf32>
    %cst_13 = arith.constant 6.400000e+01 : f32
    %19 = vector.broadcast %cst_13 : f32 to vector<8x1xf32>
    %20 = arith.divf %18, %19 : vector<8x1xf32>
    %cst_14 = arith.constant 1.000000e-03 : f32
    %21 = vector.broadcast %cst_14 : f32 to vector<8x1xf32>
    %22 = arith.addf %20, %21 : vector<8x1xf32>
    %23 = math.rsqrt %22 : vector<8x1xf32>
    %24 = vector.broadcast %23 : vector<8x1xf32> to vector<8x64xf32>
    %25 = arith.mulf %15, %24 : vector<8x64xf32>
    %c0_15 = arith.constant 0 : index
    %c0_16 = arith.constant 0 : index
    %26 = vector.load %arg6[%c0_15, %c0_16] : memref<1x64xf32, #tpu.memory_space<vmem>>, vector<1x64xf32>
    %27 = vector.broadcast %26 : vector<1x64xf32> to vector<8x64xf32>
    %28 = arith.mulf %25, %27 : vector<8x64xf32>
    %c0_17 = arith.constant 0 : index
    %c0_18 = arith.constant 0 : index
    %29 = vector.load %arg7[%c0_17, %c0_18] : memref<1x64xf32, #tpu.memory_space<vmem>>, vector<1x64xf32>
    %30 = vector.broadcast %29 : vector<1x64xf32> to vector<8x64xf32>
    %31 = arith.addf %28, %30 : vector<8x64xf32>
    %32 = arith.negf %31 : vector<8x64xf32>
    %33 = math.exp %32 : vector<8x64xf32>
    %cst_19 = arith.constant 1.000000e+00 : f32
    %34 = vector.broadcast %cst_19 : f32 to vector<8x64xf32>
    %35 = arith.addf %34, %33 : vector<8x64xf32>
    %36 = arith.divf %34, %35 : vector<8x64xf32>
    %37 = arith.mulf %31, %36 : vector<8x64xf32>
    %c0_20 = arith.constant 0 : index
    %c0_21 = arith.constant 0 : index
    %38 = vector.load %arg8[%c0_20, %c0_21] : memref<64x32xf32, #tpu.memory_space<vmem>>, vector<64x32xf32>
    %cst_22 = arith.constant dense<0.000000e+00> : vector<8x32xf32>
    %39 = tpu.matmul %37, %38, %cst_22 {dimension_numbers = #tpu.dot_dimension_numbers<[1], [0], [0], [1], [0, 0, 1, 1], [], []>} : vector<8x64xf32>, vector<64x32xf32>, vector<8x32xf32> -> vector<8x32xf32>
    %c0_23 = arith.constant 0 : index
    %c0_24 = arith.constant 0 : index
    %40 = vector.load %arg9[%c0_23, %c0_24] : memref<32x32xf32, #tpu.memory_space<vmem>>, vector<32x32xf32>
    %cst_25 = arith.constant dense<0.000000e+00> : vector<8x32xf32>
    %41 = tpu.matmul %0, %40, %cst_25 {dimension_numbers = #tpu.dot_dimension_numbers<[1], [0], [0], [1], [0, 0, 1, 1], [], []>} : vector<8x32xf32>, vector<32x32xf32>, vector<8x32xf32> -> vector<8x32xf32>
    %42 = arith.addf %39, %41 : vector<8x32xf32>
    %c0_26 = arith.constant 0 : index
    %c0_27 = arith.constant 0 : index
    %43 = vector.load %arg10[%c0_26, %c0_27] : memref<1x32xf32, #tpu.memory_space<vmem>>, vector<1x32xf32>
    %44 = vector.broadcast %43 : vector<1x32xf32> to vector<8x32xf32>
    %45 = arith.addf %42, %44 : vector<8x32xf32>
    %cst_28 = arith.constant dense<0xFF800000> : vector<8xf32>
    %46 = vector.multi_reduction <maximumf>, %45, %cst_28 [1] : vector<8x32xf32> to vector<8xf32>
    %47 = vector.shape_cast %46 : vector<8xf32> to vector<8x1xf32>
    %48 = vector.broadcast %47 : vector<8x1xf32> to vector<8x32xf32>
    %49 = arith.subf %45, %48 : vector<8x32xf32>
    %50 = math.exp %49 : vector<8x32xf32>
    %c0_29 = arith.constant 0 : index
    %c0_30 = arith.constant 0 : index
    %51 = vector.load %arg11[%c0_29, %c0_30] : memref<32x32xf32, #tpu.memory_space<vmem>>, vector<32x32xf32>
    %cst_31 = arith.constant dense<0.000000e+00> : vector<8x32xf32>
    %52 = tpu.matmul %50, %51, %cst_31 {dimension_numbers = #tpu.dot_dimension_numbers<[1], [0], [0], [1], [0, 0, 1, 1], [], []>} : vector<8x32xf32>, vector<32x32xf32>, vector<8x32xf32> -> vector<8x32xf32>
    %53 = math.log %52 : vector<8x32xf32>
    %54 = arith.subf %49, %53 : vector<8x32xf32>
    %c0_32 = arith.constant 0 : index
    %c0_33 = arith.constant 0 : index
    %55 = vector.load %arg12[%c0_32, %c0_33] : memref<8x32xf32, #tpu.memory_space<vmem>>, vector<8x32xf32>
    tpu.vector_store %arg12[%c0_32, %c0_33], %54 {strides = array<i32>} : memref<8x32xf32, #tpu.memory_space<vmem>>, vector<8x32xf32>,
    return
  }
  func.func @transform_0(%arg0: i32) -> (i32, i32) {
    %c0_i32 = arith.constant 0 : i32
    %c0_i32_0 = arith.constant 0 : i32
    return %arg0, %c0_i32 : i32, i32
  }
  func.func @transform_1(%arg0: i32) -> (i32, i32) {
    %c0_i32 = arith.constant 0 : i32
    %c0_i32_0 = arith.constant 0 : i32
    return %arg0, %c0_i32 : i32, i32
  }
  func.func @transform_2(%arg0: i32) -> (i32, i32) {
    %c0_i32 = arith.constant 0 : i32
    %c0_i32_0 = arith.constant 0 : i32
    %c0_i32_1 = arith.constant 0 : i32
    return %c0_i32, %c0_i32_0 : i32, i32
  }
  func.func @transform_3(%arg0: i32) -> (i32, i32) {
    %c0_i32 = arith.constant 0 : i32
    %c0_i32_0 = arith.constant 0 : i32
    %c0_i32_1 = arith.constant 0 : i32
    return %c0_i32, %c0_i32_0 : i32, i32
  }
  func.func @transform_4(%arg0: i32) -> (i32, i32) {
    %c0_i32 = arith.constant 0 : i32
    %c0_i32_0 = arith.constant 0 : i32
    %c0_i32_1 = arith.constant 0 : i32
    return %c0_i32, %c0_i32_0 : i32, i32
  }
  func.func @transform_5(%arg0: i32) -> (i32, i32) {
    %c0_i32 = arith.constant 0 : i32
    %c0_i32_0 = arith.constant 0 : i32
    %c0_i32_1 = arith.constant 0 : i32
    return %c0_i32, %c0_i32_0 : i32, i32
  }
  func.func @transform_6(%arg0: i32) -> (i32, i32) {
    %c0_i32 = arith.constant 0 : i32
    %c0_i32_0 = arith.constant 0 : i32
    %c0_i32_1 = arith.constant 0 : i32
    return %c0_i32, %c0_i32_0 : i32, i32
  }
  func.func @transform_7(%arg0: i32) -> (i32, i32) {
    %c0_i32 = arith.constant 0 : i32
    %c0_i32_0 = arith.constant 0 : i32
    %c0_i32_1 = arith.constant 0 : i32
    return %c0_i32, %c0_i32_0 : i32, i32
  }
  func.func @transform_8(%arg0: i32) -> (i32, i32) {
    %c0_i32 = arith.constant 0 : i32
    %c0_i32_0 = arith.constant 0 : i32
    %c0_i32_1 = arith.constant 0 : i32
    return %c0_i32, %c0_i32_0 : i32, i32
  }
  func.func @transform_9(%arg0: i32) -> (i32, i32) {
    %c0_i32 = arith.constant 0 : i32
    %c0_i32_0 = arith.constant 0 : i32
    %c0_i32_1 = arith.constant 0 : i32
    return %c0_i32, %c0_i32_0 : i32, i32
  }
  func.func @transform_10(%arg0: i32) -> (i32, i32) {
    %c0_i32 = arith.constant 0 : i32
    %c0_i32_0 = arith.constant 0 : i32
    %c0_i32_1 = arith.constant 0 : i32
    return %c0_i32, %c0_i32_0 : i32, i32
  }
  func.func @transform_11(%arg0: i32) -> (i32, i32) {
    %c0_i32 = arith.constant 0 : i32
    %c0_i32_0 = arith.constant 0 : i32
    return %arg0, %c0_i32 : i32, i32
  }
}

</mosaic_0001>

<llo_original>
// kernel: tpu_custom_call.1
$region0: #{tpu_custom_call.1}
  #allocation0 [shape = 'u32[]', space=smem, size = 0x4, offset = 0x4, fixed_abs, tag = 'smem constant byte address 0x4 - core index']
  #allocation1 [shape = 'u32[72,128]{1,0:T(1,128)}', space=vmem, size = 0x9000, scoped, tag = 'internal scratch']
  %s0 = inlined_call_operand.hbm [shape: f32[8,32], index: 0, kind: input, shape index: {}]
  %s1 = inlined_call_operand.hbm [shape: f32[8,32], index: 1, kind: input, shape index: {}]
  %s2 = inlined_call_operand.vmem [shape: f32[32,64], index: 2, kind: input, shape index: {}]
  %s3 = inlined_call_operand.vmem [shape: f32[32,64], index: 3, kind: input, shape index: {}]
  %s4 = inlined_call_operand.vmem [shape: f32[1,64], index: 4, kind: input, shape index: {}]
  %s5 = inlined_call_operand.vmem [shape: f32[1,64], index: 5, kind: input, shape index: {}]
  %s6 = inlined_call_operand.vmem [shape: f32[1,64], index: 6, kind: input, shape index: {}]
  %s7 = inlined_call_operand.vmem [shape: f32[64,32], index: 7, kind: input, shape index: {}]
  %s8 = inlined_call_operand.vmem [shape: f32[32,32], index: 8, kind: input, shape index: {}]
  %s9 = inlined_call_operand.vmem [shape: f32[1,32], index: 9, kind: input, shape index: {}]
  %s10 = inlined_call_operand.hbm [shape: f32[32,32], index: 10, kind: input, shape index: {}]
  %s11 = inlined_call_operand.hbm [shape: f32[8,32], index: 11, kind: output, shape index: {}]
  %s12 = sld [smem:[#allocation0]]
  $region66: #{tpu_custom_call.1} parent=0
    _
  %s14 = ssub.s32 1, %s12
  %s15 = scalar_select 0, %s14, %s12
  $region1: #{tpu_custom_call.1} parent=0
    #allocation2 [shape = 'u8[4096]{0}', space=vmem, size = 0x1000, scoped, tag = 'input window, operand 0, single buffered']
    #allocation3 [shape = 's32[1]{0}', space=sflag, size = 0x4, scoped, tag = 'scoped memory for tpu_custom_call.1']
    #allocation4 [shape = 's32[1]{0}', space=sflag, size = 0x4, scoped, tag = 'scoped memory for tpu_custom_call.1']
    #allocation5 [shape = 'u8[4096]{0}', space=vmem, size = 0x1000, scoped, tag = 'input window, operand 1, single buffered']
    #allocation6 [shape = 's32[1]{0}', space=sflag, size = 0x4, scoped, tag = 'scoped memory for tpu_custom_call.1']
    #allocation7 [shape = 'u8[16384]{0}', space=vmem, size = 0x4000, scoped, tag = 'input window, operand 10, single buffered']
    #allocation8 [shape = 'u8[4096]{0}', space=vmem, size = 0x1000, scoped, tag = 'output window, operand 0, single buffered']
    %16 = vsyncpa [#allocation3], 0
    %17 = vsyncpa [#allocation6], 0
    %18 = vsyncpa [#allocation4], 0
    // Predicated region
    $region2: #{tpu_custom_call.1} parent=1 // pred_check
      _
    $region3: #{tpu_custom_call.1} parent=1 // pred_check_branch
      %20 = sbr.rel (0) target = $region5
    $region4: #{tpu_custom_call.1} parent=1 // pred_region
      %22 = vsyncadd [#allocation3], 0
      %s24 = sshll.u32 %s0, 4
      %s25 = int_to_ptr.hbm [resolvable:$true] %s24
      %s26 = sshll.u32 [#allocation2], 4
      %s27 = int_to_ptr.vmem [resolvable:$true] %s26
      %29 = dma.hbm_to_vmem [thread:$0]  %s25, 128, %s27, [#allocation3]
    $region5: #{tpu_custom_call.1} parent=1 // pred_fallthru
      _
    // Predicated region
    $region6: #{tpu_custom_call.1} parent=1 // pred_check
      _
    $region7: #{tpu_custom_call.1} parent=1 // pred_check_branch
      %31 = sbr.rel (0) target = $region9
    $region8: #{tpu_custom_call.1} parent=1 // pred_region
      %33 = vsyncadd [#allocation6], 0
      %s35 = sshll.u32 %s1, 4
      %s36 = int_to_ptr.hbm [resolvable:$true] %s35
      %s37 = sshll.u32 [#allocation5], 4
      %s38 = int_to_ptr.vmem [resolvable:$true] %s37
      %40 = dma.hbm_to_vmem [thread:$0]  %s36, 128, %s38, [#allocation6]
    $region9: #{tpu_custom_call.1} parent=1 // pred_fallthru
      _
    // Predicated region
    $region10: #{tpu_custom_call.1} parent=1 // pred_check
      _
    $region11: #{tpu_custom_call.1} parent=1 // pred_check_branch
      %42 = sbr.rel (0) target = $region13
    $region12: #{tpu_custom_call.1} parent=1 // pred_region
      _
    $region13: #{tpu_custom_call.1} parent=1 // pred_fallthru
      _
    // Predicated region
    $region14: #{tpu_custom_call.1} parent=1 // pred_check
      _
    $region15: #{tpu_custom_call.1} parent=1 // pred_check_branch
      %44 = sbr.rel (0) target = $region17
    $region16: #{tpu_custom_call.1} parent=1 // pred_region
      _
    $region17: #{tpu_custom_call.1} parent=1 // pred_fallthru
      _
    // Predicated region
    $region18: #{tpu_custom_call.1} parent=1 // pred_check
      _
    $region19: #{tpu_custom_call.1} parent=1 // pred_check_branch
      %46 = sbr.rel (0) target = $region21
    $region20: #{tpu_custom_call.1} parent=1 // pred_region
      _
    $region21: #{tpu_custom_call.1} parent=1 // pred_fallthru
      _
    // Predicated region
    $region22: #{tpu_custom_call.1} parent=1 // pred_check
      _
    $region23: #{tpu_custom_call.1} parent=1 // pred_check_branch
      %48 = sbr.rel (0) target = $region25
    $region24: #{tpu_custom_call.1} parent=1 // pred_region
      _
    $region25: #{tpu_custom_call.1} parent=1 // pred_fallthru
      _
    // Predicated region
    $region26: #{tpu_custom_call.1} parent=1 // pred_check
      _
    $region27: #{tpu_custom_call.1} parent=1 // pred_check_branch
      %50 = sbr.rel (0) target = $region29
    $region28: #{tpu_custom_call.1} parent=1 // pred_region
      _
    $region29: #{tpu_custom_call.1} parent=1 // pred_fallthru
      _
    // Predicated region
    $region30: #{tpu_custom_call.1} parent=1 // pred_check
      _
    $region31: #{tpu_custom_call.1} parent=1 // pred_check_branch
      %52 = sbr.rel (0) target = $region33
    $region32: #{tpu_custom_call.1} parent=1 // pred_region
      _
    $region33: #{tpu_custom_call.1} parent=1 // pred_fallthru
      _
    // Predicated region
    $region34: #{tpu_custom_call.1} parent=1 // pred_check
      _
    $region35: #{tpu_custom_call.1} parent=1 // pred_check_branch
      %54 = sbr.rel (0) target = $region37
    $region36: #{tpu_custom_call.1} parent=1 // pred_region
      _
    $region37: #{tpu_custom_call.1} parent=1 // pred_fallthru
      _
    // Predicated region
    $region38: #{tpu_custom_call.1} parent=1 // pred_check
      _
    $region39: #{tpu_custom_call.1} parent=1 // pred_check_branch
      %56 = sbr.rel (0) target = $region41
    $region40: #{tpu_custom_call.1} parent=1 // pred_region
      _
    $region41: #{tpu_custom_call.1} parent=1 // pred_fallthru
      _
    // Predicated region
    $region42: #{tpu_custom_call.1} parent=1 // pred_check
      _
    $region43: #{tpu_custom_call.1} parent=1 // pred_check_branch
      %58 = sbr.rel (0) target = $region45
    $region44: #{tpu_custom_call.1} parent=1 // pred_region
      %60 = vsyncadd [#allocation6], 0
      %s61 = sshll.u32 %s10, 4
      %s62 = int_to_ptr.hbm [resolvable:$true] %s61
      %s63 = sshll.u32 [#allocation7], 4
      %s64 = int_to_ptr.vmem [resolvable:$true] %s63
      %69 = dma.hbm_to_vmem [thread:$0]  %s62, 512, %s64, [#allocation6], 128, 128, 8
    $region45: #{tpu_custom_call.1} parent=1 // pred_fallthru
      _
    // Predicated region
    $region46: #{tpu_custom_call.1} parent=1 // pred_check
      _
    $region47: #{tpu_custom_call.1} parent=1 // pred_check_branch
      %71 = sbr.rel (0) target = $region49
    $region48: #{tpu_custom_call.1} parent=1 // pred_region
      %73 = dma.done [#allocation3], 128
    $region49: #{tpu_custom_call.1} parent=1 // pred_fallthru
      _
    // Predicated region
    $region50: #{tpu_custom_call.1} parent=1 // pred_check
      _
    $region51: #{tpu_custom_call.1} parent=1 // pred_check_branch
      %75 = sbr.rel (0) target = $region53
    $region52: #{tpu_custom_call.1} parent=1 // pred_region
      %77 = dma.done [#allocation6], 128
    $region53: #{tpu_custom_call.1} parent=1 // pred_fallthru
      _
    // Predicated region
    $region54: #{tpu_custom_call.1} parent=1 // pred_check
      _
    $region55: #{tpu_custom_call.1} parent=1 // pred_check_branch
      %79 = sbr.rel (0) target = $region57
    $region56: #{tpu_custom_call.1} parent=1 // pred_region
      %81 = dma.done [#allocation6], 512
    $region57: #{tpu_custom_call.1} parent=1 // pred_fallthru
      _
    %v82 = vld [vmem:[#allocation2] sm:$0xff]
    %v83 = vld [vmem:[%s2] sm:$0xff]
    %v84 = vld [vmem:[%s2 + $0x8] sm:$0xff]
    %v85 = vld [vmem:[%s2 + $0x10] sm:$0xff]
    %v86 = vld [vmem:[%s2 + $0x18] sm:$0xff]
    %v87 = vld [vmem:[#allocation5] sm:$0xff]
    %v88 = vld [vmem:[%s3] sm:$0xff]
    %v89 = vld [vmem:[%s3 + $0x8] sm:$0xff]
    %v90 = vld [vmem:[%s3 + $0x10] sm:$0xff]
    %v91 = vld [vmem:[%s3 + $0x18] sm:$0xff]
    %vm92 = vcmask 261120
    %v94 = vsel %vm92, %v87, 0
    %96 = vmatpush.msra.mxu0 0.0
    %97 = vmatpush.msra.mxu0 0.0
    %98 = vmatpush.msra.mxu0 0.0
    %99 = vmatpush.msra.mxu0 0.0
    %100 = vmatpush.msra.mxu0 0.0
    %101 = vmatpush.msra.mxu0 0.0
    %102 = vmatpush.msra.mxu0 0.0
    %103 = vmatpush.msra.mxu0 0.0
    %104 = vmatpush.msra.mxu0 0.0
    %105 = vmatpush.msra.mxu0 0.0
    %106 = vmatpush.msra.mxu0 0.0
    %107 = vmatpush.msra.mxu0 0.0
    %108 = vmatpush.msra.mxu0 %v91
    %109 = vmatpush.msra.mxu0 %v90
    %110 = vmatpush.msra.mxu0 %v89
    %111 = vmatpush.msra.mxu0 %v88
    %112 = vmatmul.f32.gmra.mxu0 %v94
    %v113 = vpop.f32.mrf.mxu0
    %v114 = vadd.f32 0.0, %v113
    %115 = vdwg.mxu0
    %v117 = vsel %vm92, %v82, 0
    %119 = vmatpush.msra.mxu0 0.0
    %120 = vmatpush.msra.mxu0 0.0
    %121 = vmatpush.msra.mxu0 0.0
    %122 = vmatpush.msra.mxu0 0.0
    %123 = vmatpush.msra.mxu0 0.0
    %124 = vmatpush.msra.mxu0 0.0
    %125 = vmatpush.msra.mxu0 0.0
    %126 = vmatpush.msra.mxu0 0.0
    %127 = vmatpush.msra.mxu0 0.0
    %128 = vmatpush.msra.mxu0 0.0
    %129 = vmatpush.msra.mxu0 0.0
    %130 = vmatpush.msra.mxu0 0.0
    %131 = vmatpush.msra.mxu0 %v86
    %132 = vmatpush.msra.mxu0 %v85
    %133 = vmatpush.msra.mxu0 %v84
    %134 = vmatpush.msra.mxu0 %v83
    %135 = vmatmul.f32.gmra.mxu0 %v117
    %v136 = vpop.f32.mrf.mxu0
    %v137 = vadd.f32 %v114, %v136
    %138 = vdwg.mxu0
    %v139 = vld [vmem:[%s4] sm:$0x1]
    %v141 = vperm.slane %v139, 0
    %v143 = vadd.f32 %v137, %v141
    %vm144 = vcmask 523264
    %v145 = vsel %vm144, %v143, 0.0
    %146 = vadd.xlane.f32.xlu0 %v145
    %v147 = vpop.xlane.xlu0 %146
    %v148 = vrcp.pop 64.0
    %v149 = vmul.f32 64.0, %v148
    %v150 = vsub.f32 1.0, %v149
    %v151 = vmul.f32 %v148, %v150
    %v152 = vadd.f32 %v148, %v151
    %vm153 = vweird.f32 %v148
    %v154 = vsel %vm153, %v148, %v152
    %v155 = vmul.f32 %v147, %v154
    %v156 = vsub.f32 %v143, %v155
    %v157 = vmul.f32 %v156, %v156
    %v158 = vsel %vm144, %v157, 0.0
    %159 = vadd.xlane.f32.xlu0 %v158
    %v160 = vpop.xlane.xlu0 %159
    %v161 = vmul.f32 %v160, %v154
    %v162 = vadd.f32 %v161, 0.001
    %v163 = vrsqrt.pop %v162
    %v164 = vmul.f32 %v163, %v162
    %v165 = vmul.f32 %v164, %v163
    %v166 = vmul.f32 0.5, %v165
    %v167 = vsub.f32 1.5, %v166
    %v168 = vmul.f32 %v163, %v167
    %vm169 = vweird.f32 %v162
    %vm170 = vweird.f32 %v163
    %vm171 = vmor %vm169, %vm170
    %v172 = vsel %vm171, %v163, %v168
    %v173 = vmul.f32 %v156, %v172
    %v174 = vld [vmem:[%s5] sm:$0x1]
    %v176 = vperm.slane %v174, 0
    %v178 = vmul.f32 %v173, %v176
    %v179 = vld [vmem:[%s6] sm:$0x1]
    %v181 = vperm.slane %v179, 0
    %v183 = vadd.f32 %v178, %v181
    %v184 = vxor.u32 %v183, 2147483648
    %v185 = vmul.f32 %v184, 1.442695
    %v186 = vpow.pop %v185
    %v187 = vadd.f32 %v186, 1.0
    %v188 = vrcp.pop %v187
    %v189 = vmul.f32 %v187, %v188
    %v190 = vsub.f32 1.0, %v189
    %v191 = vmul.f32 %v188, %v190
    %v192 = vadd.f32 %v188, %v191
    %vm193 = vweird.f32 %v187
    %vm194 = vweird.f32 %v188
    %vm195 = vmor %vm193, %vm194
    %v196 = vsel %vm195, %v188, %v192
    %v197 = vand.u32 2147483647, %v187
    %vm198 = vcmp.eq.f32.partialorder %v197, 8.507059e+37
    %v199 = vand.u32 %v187, 2147483648
    %v200 = vor.u32 1.1754944e-38, %v199
    %v201 = vsel %vm198, %v200, %v196
    %v202 = vmul.f32 1.0, %v201
    %v203 = vmul.f32 %v183, %v202
    %v204 = vld [vmem:[%s7] sm:$0xff]
    %v205 = vld [vmem:[%s7 + $0x8] sm:$0xff]
    %v206 = vld [vmem:[%s7 + $0x10] sm:$0xff]
    %v207 = vld [vmem:[%s7 + $0x18] sm:$0xff]
    %v208 = vld [vmem:[%s7 + $0x20] sm:$0xff]
    %v209 = vld [vmem:[%s7 + $0x28] sm:$0xff]
    %v210 = vld [vmem:[%s7 + $0x30] sm:$0xff]
    %v211 = vld [vmem:[%s7 + $0x38] sm:$0xff]
    %v212 = vld [vmem:[%s8] sm:$0xff]
    %v213 = vld [vmem:[%s8 + $0x8] sm:$0xff]
    %v214 = vld [vmem:[%s8 + $0x10] sm:$0xff]
    %v215 = vld [vmem:[%s8 + $0x18] sm:$0xff]
    %216 = vmatpush.msra.mxu0 0.0
    %217 = vmatpush.msra.mxu0 0.0
    %218 = vmatpush.msra.mxu0 0.0
    %219 = vmatpush.msra.mxu0 0.0
    %220 = vmatpush.msra.mxu0 0.0
    %221 = vmatpush.msra.mxu0 0.0
    %222 = vmatpush.msra.mxu0 0.0
    %223 = vmatpush.msra.mxu0 0.0
    %224 = vmatpush.msra.mxu0 0.0
    %225 = vmatpush.msra.mxu0 0.0
    %226 = vmatpush.msra.mxu0 0.0
    %227 = vmatpush.msra.mxu0 0.0
    %228 = vmatpush.msra.mxu0 %v215
    %229 = vmatpush.msra.mxu0 %v214
    %230 = vmatpush.msra.mxu0 %v213
    %231 = vmatpush.msra.mxu0 %v212
    %232 = vmatmul.f32.gmra.mxu0 %v117
    %v233 = vpop.f32.mrf.mxu0
    %v234 = vadd.f32 0.0, %v233
    %235 = vdwg.mxu0
    %v237 = vsel %vm144, %v203, 0
    %239 = vmatpush.msra.mxu0 0.0
    %240 = vmatpush.msra.mxu0 0.0
    %241 = vmatpush.msra.mxu0 0.0
    %242 = vmatpush.msra.mxu0 0.0
    %243 = vmatpush.msra.mxu0 0.0
    %244 = vmatpush.msra.mxu0 0.0
    %245 = vmatpush.msra.mxu0 0.0
    %246 = vmatpush.msra.mxu0 0.0
    %247 = vmatpush.msra.mxu0 %v211
    %248 = vmatpush.msra.mxu0 %v210
    %249 = vmatpush.msra.mxu0 %v209
    %250 = vmatpush.msra.mxu0 %v208
    %251 = vmatpush.msra.mxu0 %v207
    %252 = vmatpush.msra.mxu0 %v206
    %253 = vmatpush.msra.mxu0 %v205
    %254 = vmatpush.msra.mxu0 %v204
    %255 = vmatmul.f32.gmra.mxu0 %v237
    %v256 = vpop.f32.mrf.mxu0
    %v257 = vadd.f32 %v234, %v256
    %258 = vdwg.mxu0
    %v259 = vld [vmem:[%s9] sm:$0x1]
    %v261 = vperm.slane %v259, 0
    %v263 = vadd.f32 %v257, %v261
    %v264 = vsel %vm92, %v263, -inf
    %265 = vmax.xlane.f32.xlu0 %v264
    %v266 = vpop.xlane.xlu0 %265
    %v267 = vsub.f32 %v263, %v266
    %v268 = vmul.f32 %v267, 1.442695
    %v269 = vpow.pop %v268
    %v270 = vld [vmem:[#allocation7] sm:$0xff]
    %v271 = vld [vmem:[#allocation7 + $0x8] sm:$0xff]
    %v272 = vld [vmem:[#allocation7 + $0x10] sm:$0xff]
    %v273 = vld [vmem:[#allocation7 + $0x18] sm:$0xff]
    %v275 = vsel %vm92, %v269, 0
    %277 = vmatpush.msra.mxu0 0.0
    %278 = vmatpush.msra.mxu0 0.0
    %279 = vmatpush.msra.mxu0 0.0
    %280 = vmatpush.msra.mxu0 0.0
    %281 = vmatpush.msra.mxu0 0.0
    %282 = vmatpush.msra.mxu0 0.0
    %283 = vmatpush.msra.mxu0 0.0
    %284 = vmatpush.msra.mxu0 0.0
    %285 = vmatpush.msra.mxu0 0.0
    %286 = vmatpush.msra.mxu0 0.0
    %287 = vmatpush.msra.mxu0 0.0
    %288 = vmatpush.msra.mxu0 0.0
    %289 = vmatpush.msra.mxu0 %v273
    %290 = vmatpush.msra.mxu0 %v272
    %291 = vmatpush.msra.mxu0 %v271
    %292 = vmatpush.msra.mxu0 %v270
    %293 = vmatmul.f32.gmra.mxu0 %v275
    %v294 = vpop.f32.mrf.mxu0
    %v295 = vadd.f32 0.0, %v294
    %296 = vdwg.mxu0
    %v297 = vlog2.pop %v295
    %v298 = vmul.f32 %v297, 0.6931472
    %v299 = vsub.f32 %v267, %v298
    %300 = vst.msk [vmem:[#allocation8] sm:$0xff] %vm92, %v299
    // Predicated region
    $region58: #{tpu_custom_call.1} parent=1 // pred_check
      _
    $region59: #{tpu_custom_call.1} parent=1 // pred_check_branch
      %302 = sbr.rel (0) target = $region61
    $region60: #{tpu_custom_call.1} parent=1 // pred_region
      %304 = vsyncadd [#allocation4], 0
      %s306 = sshll.u32 [#allocation8], 4
      %s307 = int_to_ptr.vmem [resolvable:$true] %s306
      %s308 = sshll.u32 %s11, 4
      %s309 = int_to_ptr.hbm [resolvable:$true] %s308
      %311 = dma.vmem_to_hbm [thread:$0]  %s307, 128, %s309, [#allocation4]
    $region61: #{tpu_custom_call.1} parent=1 // pred_fallthru
      _
    // Predicated region
    $region62: #{tpu_custom_call.1} parent=1 // pred_check
      _
    $region63: #{tpu_custom_call.1} parent=1 // pred_check_branch
      %313 = sbr.rel (0) target = $region65
    $region64: #{tpu_custom_call.1} parent=1 // pred_region
      %315 = dma.done [#allocation4], 128
    $region65: #{tpu_custom_call.1} parent=1 // pred_fallthru
      _
    %316 = vsyncpa [#allocation3], 1
    %317 = vsyncpa [#allocation6], 1
    %318 = vsyncpa [#allocation4], 1

</llo_original>
